<compile_context>
chip_gen: v7x
topology: tpu7x:2x2x1
jax: 0.10.0
libtpu: 0.0.40
codegen_flags: <defaults>
</compile_context>

<pallas_src>
import math
from functools import partial

import jax
import jax.numpy as jnp
from jax.experimental import pallas as pl
from jax.experimental.pallas import tpu as pltpu


# --------------------------------------------------------------------------
# Helpers
# --------------------------------------------------------------------------
def _round_up(x, m):
    return (x + m - 1) // m * m


def _pick_tile(np_, cap):
    """Largest multiple of 128 that divides np_ (a multiple of 128) and <= cap."""
    nb = np_ // 128
    best = 1
    for d in range(1, nb + 1):
        if nb % d == 0 and 128 * d <= cap:
            best = d
    return 128 * best


def _pad2(x, rows, cols):
    pr, pc = rows - x.shape[0], cols - x.shape[1]
    if pr or pc:
        x = jnp.pad(x, ((0, pr), (0, pc)))
    return x


# --------------------------------------------------------------------------
# Kernels
# --------------------------------------------------------------------------
def _make_gcn_kernel(*, fuse_w, resident_rhs, tk):
    """acc += A_tile @ rhs over k tiles; at k==last: out = relu(acc [@ Wt]).

    a_ref   : (tm, tk) f32 tile of A (cast to bf16 in-kernel -> native MXU path)
    rhs_ref : bf16 X or H; either a streamed (tk, feat) tile or the full
              VMEM-resident (Np, feat) block (sliced with pl.ds per k step)
    wt_ref  : (din_p, dout_p) bf16, VMEM-resident (only when fuse_w)
    o_ref   : (tm, dout_p) output tile
    acc_ref : (tm, feat_acc) f32 scratch accumulator
    """

    def _body(a_ref, rhs_ref, o_ref, acc_ref, wt_ref):
        k = pl.program_id(1)

        @pl.when(k == 0)
        def _():
            acc_ref[...] = jnp.zeros_like(acc_ref)

        if resident_rhs:
            start = pl.multiple_of(k * tk, 128)
            rhs = rhs_ref[pl.ds(start, tk), :]
        else:
            rhs = rhs_ref[...]

        acc_ref[...] += jnp.dot(a_ref[...].astype(jnp.bfloat16), rhs,
                                preferred_element_type=jnp.float32)

        @pl.when(k == pl.num_programs(1) - 1)
        def _():
            if fuse_w:
                h = jnp.dot(acc_ref[...].astype(jnp.bfloat16), wt_ref[...],
                            preferred_element_type=jnp.float32)
            else:
                h = acc_ref[...]
            o_ref[...] = jnp.maximum(h, 0.0).astype(o_ref.dtype)

    if fuse_w:
        def kernel(a_ref, rhs_ref, wt_ref, o_ref, acc_ref):
            _body(a_ref, rhs_ref, o_ref, acc_ref, wt_ref)
    else:
        def kernel(a_ref, rhs_ref, o_ref, acc_ref):
            _body(a_ref, rhs_ref, o_ref, acc_ref, None)
    return kernel


def _project_kernel(x_ref, wt_ref, h_ref):
    """H_tile = X_tile @ Wt (bf16 out; feeds the A @ H matmul)."""
    h = jnp.dot(x_ref[...], wt_ref[...], preferred_element_type=jnp.float32)
    h_ref[...] = h.astype(h_ref.dtype)


# --------------------------------------------------------------------------
# Wrapper
# --------------------------------------------------------------------------
@partial(jax.jit, static_argnames=("tm_cap", "tk_cap", "rhs_resident_max_bytes"))
def gcn_forward(A, X, W, *, tm_cap=512, tk_cap=None,
                rhs_resident_max_bytes=4 * 1024 * 1024):
    """relu((A @ X) @ W.T) with W in PyTorch nn.Linear layout [dim_out, dim_in]."""
    N = A.shape[0]
    dim_in = X.shape[1]
    dim_out = W.shape[0]
    assert A.shape == (N, N) and X.shape == (N, dim_in)
    assert W.shape == (dim_out, dim_in)

    # Lane-dense feature dims; node dim padded only to the next 128 multiple.
    din_p = _round_up(dim_in, 128)
    dout_p = _round_up(dim_out, 128)
    Np = _round_up(N, 128)

    # Tile selection: multiples of 128 that divide Np.  tk cap shrinks for
    # wide feature dims (VMEM budget); tm is capped at Np//2 when possible so
    # the "parallel" row axis has >= 2 blocks for v7x's two TensorCores.
    feat_max = max(din_p, dout_p)
    if tk_cap is None:
        tk_cap = 2048 if feat_max <= 256 else (1024 if feat_max <= 512 else 512)
    row_cap = min(tm_cap, max(128, Np // 2)) if Np >= 256 else tm_cap
    tm = _pick_tile(Np, row_cap)
    tk = _pick_tile(Np, tk_cap)

    # A stays f32 (per-tile bf16 cast happens in-kernel); X/W are small so a
    # one-time pad+bf16 cast in the wrapper is negligible.  Zero padding is
    # exact (padded rows/cols contribute nothing and are sliced off).
    A_p = _pad2(A, Np, Np)
    X_p = _pad2(X, Np, din_p).astype(jnp.bfloat16)
    Wt_p = _pad2(W.T, din_p, dout_p).astype(jnp.bfloat16)

    fuse_w = dim_in <= dim_out   # (A@X)@Wt ; otherwise re-associate A@(X@Wt)

    if fuse_w:
        rhs, feat_rhs, acc_feat = X_p, din_p, din_p
    else:
        # H = X @ Wt first (features shrink), then out = relu(A @ H).
        proj_tm = _pick_tile(Np, 512)
        rhs = pl.pallas_call(
            _project_kernel,
            out_shape=jax.ShapeDtypeStruct((Np, dout_p), jnp.bfloat16),
            grid=(Np // proj_tm,),
            in_specs=[
                pl.BlockSpec((proj_tm, din_p), lambda i: (i, 0)),
                pl.BlockSpec((din_p, dout_p), lambda i: (0, 0)),
            ],
            out_specs=pl.BlockSpec((proj_tm, dout_p), lambda i: (i, 0)),
            compiler_params=pltpu.CompilerParams(
                dimension_semantics=("parallel",)),
        )(X_p, Wt_p)
        feat_rhs, acc_feat = dout_p, dout_p

    # Keep the RHS (X or H) fully VMEM-resident when small: DMA'd from HBM
    # once for the whole grid instead of once per row tile.
    resident_rhs = Np * feat_rhs * 2 <= rhs_resident_max_bytes

    kernel = _make_gcn_kernel(fuse_w=fuse_w, resident_rhs=resident_rhs, tk=tk)

    in_specs = [pl.BlockSpec((tm, tk), lambda i, k: (i, k))]            # A (f32)
    if resident_rhs:
        in_specs.append(pl.BlockSpec((Np, feat_rhs), lambda i, k: (0, 0)))
    else:
        in_specs.append(pl.BlockSpec((tk, feat_rhs), lambda i, k: (k, 0)))
    operands = [A_p, rhs]
    if fuse_w:
        in_specs.append(pl.BlockSpec((din_p, dout_p), lambda i, k: (0, 0)))
        operands.append(Wt_p)

    # Explicit VMEM budget (double-buffered streams + resident blocks + acc);
    # set the scoped limit from it (covers v5e's 16 MiB default scoped VMEM
    # and stays under v7x's 64 MiB physical).
    est = (2 * tm * tk * 4
           + (2 * Np * feat_rhs * 2 if resident_rhs else 2 * tk * feat_rhs * 2)
           + (2 * din_p * dout_p * 2 if fuse_w else 0)
           + 2 * tm * dout_p * 4
           + tm * acc_feat * 4)
    vmem_limit = int(min(56 * 2**20, max(32 * 2**20, int(est * 1.25))))

    out_p = pl.pallas_call(
        kernel,
        out_shape=jax.ShapeDtypeStruct((Np, dout_p), jnp.float32),
        grid=(Np // tm, Np // tk),
        in_specs=in_specs,
        out_specs=pl.BlockSpec((tm, dout_p), lambda i, k: (i, 0)),
        scratch_shapes=[pltpu.VMEM((tm, acc_feat), jnp.float32)],
        compiler_params=pltpu.CompilerParams(
            dimension_semantics=("parallel", "arbitrary"),
            vmem_limit_bytes=vmem_limit),
    )(*operands)

    return out_p[:N, :dim_out]


# --------------------------------------------------------------------------
# Demo / correctness check
# --------------------------------------------------------------------------
def _ref_forward(A, X, W):
    return jnp.maximum((A @ X) @ W.T, 0.0)


if __name__ == "__main__":
    root = jax.random.PRNGKey(0)

    def _case(idx, N, din, dout, **kw):
        ka, kx, kww = jax.random.split(jax.random.fold_in(root, idx), 3)
        A = jax.random.uniform(ka, (N, N), dtype=jnp.float32)
        A = A / A.sum(axis=-1, keepdims=True)        # row-normalized adjacency
        X = jax.random.normal(kx, (N, din), dtype=jnp.float32)
        bound = 1.0 / math.sqrt(din)
        W = jax.random.uniform(kww, (dout, din), dtype=jnp.float32,
                               minval=-bound, maxval=bound)
        out = jax.block_until_ready(gcn_forward(A, X, W, **kw))
        ref = _ref_forward(A, X, W)
        assert out.shape == (N, dout), out.shape
        err = float(jnp.max(jnp.abs(out - ref)))
        assert jnp.allclose(out, ref, atol=2e-2, rtol=5e-2), err
        return out

    # 1) Module-scale widening layer (fused (A@X)@Wt path, resident X).
    _case(0, N=8, din=16, dout=32)
    # 2) Narrowing layer -> re-associated path (H = X@Wt, then relu(A@H)).
    _case(1, N=8, din=32, dout=16)
    # 3) Multi-tile grid, VMEM-resident X sliced across several k steps.
    _case(2, N=384, din=64, dout=96, tm_cap=128, tk_cap=128)
    # 4) Multi-tile grid, streamed RHS on the re-associated path.
    _case(3, N=384, din=96, dout=64, tm_cap=128, tk_cap=128,
          rhs_resident_max_bytes=0)

    print("KERNEL_OK")
</pallas_src>

<mosaic_0001>
module attributes {stable_mosaic.version = 11 : i64} {
  func.func @kernel(%arg0: i32, %arg1: i32, %arg2: memref<128x128xf32, #tpu.memory_space<vmem>>, %arg3: memref<128x128xbf16, #tpu.memory_space<vmem>>, %arg4: memref<128x128xbf16, #tpu.memory_space<vmem>>, %arg5: memref<128x128xf32, #tpu.memory_space<vmem>>, %arg6: memref<128x128xf32, #tpu.memory_space<vmem>>) attributes {dimension_semantics = [#tpu.dimension_semantics<parallel>, #tpu.dimension_semantics<arbitrary>], iteration_bounds = array<i64: 1, 1>, scalar_prefetch = 0 : i64, scratch_operands = 1 : i64, tpu.core_type = #tpu.core_type<tc>, window_params = [{transform_indices = @transform_0, window_bounds = array<i64: 128, 128>}, {pipeline_mode = #tpu.pipeline_mode<synchronous>, transform_indices = @transform_1, window_bounds = array<i64: 128, 128>}, {pipeline_mode = #tpu.pipeline_mode<synchronous>, transform_indices = @transform_2, window_bounds = array<i64: 128, 128>}, {transform_indices = @transform_3, window_bounds = array<i64: 128, 128>}]} {
    %c0_i32 = arith.constant 0 : i32
    %0 = arith.cmpi eq, %arg1, %c0_i32 : i32
    %1 = arith.extui %0 : i1 to i32
    %c0_i32_0 = arith.constant 0 : i32
    %2 = arith.cmpi ne, %1, %c0_i32_0 : i32
    scf.if %2 {
      %cst_9 = arith.constant 0.000000e+00 : f32
      %16 = vector.broadcast %cst_9 : f32 to vector<128x128xf32>
      %c0_10 = arith.constant 0 : index
      %c0_11 = arith.constant 0 : index
      %17 = vector.load %arg6[%c0_10, %c0_11] : memref<128x128xf32, #tpu.memory_space<vmem>>, vector<128x128xf32>
      tpu.vector_store %arg6[%c0_10, %c0_11], %16 {strides = array<i32>} : memref<128x128xf32, #tpu.memory_space<vmem>>, vector<128x128xf32>,
    } else {
    }
    %c128_i32 = arith.constant 128 : i32
    %3 = arith.muli %arg1, %c128_i32 : i32
    %4 = tpu.assume_multiple %3, 128 : i32
    %5 = arith.index_cast %4 : i32 to index
    %c0 = arith.constant 0 : index
    %6 = vector.load %arg3[%5, %c0] : memref<128x128xbf16, #tpu.memory_space<vmem>>, vector<128x128xbf16>
    %c0_1 = arith.constant 0 : index
    %c0_2 = arith.constant 0 : index
    %7 = vector.load %arg6[%c0_1, %c0_2] : memref<128x128xf32, #tpu.memory_space<vmem>>, vector<128x128xf32>
    %c0_3 = arith.constant 0 : index
    %c0_4 = arith.constant 0 : index
    %8 = vector.load %arg2[%c0_3, %c0_4] : memref<128x128xf32, #tpu.memory_space<vmem>>, vector<128x128xf32>
    %9 = arith.truncf %8 : vector<128x128xf32> to vector<128x128xbf16>
    %cst = arith.constant dense<0.000000e+00> : vector<128x128xf32>
    %10 = tpu.matmul %9, %6, %cst {dimension_numbers = #tpu.dot_dimension_numbers<[1], [0], [0], [1], [0, 0, 1, 1], [], []>} : vector<128x128xbf16>, vector<128x128xbf16>, vector<128x128xf32> -> vector<128x128xf32>
    %11 = arith.addf %7, %10 : vector<128x128xf32>
    %c0_5 = arith.constant 0 : index
    %c0_6 = arith.constant 0 : index
    %12 = vector.load %arg6[%c0_5, %c0_6] : memref<128x128xf32, #tpu.memory_space<vmem>>, vector<128x128xf32>
    tpu.vector_store %arg6[%c0_5, %c0_6], %11 {strides = array<i32>} : memref<128x128xf32, #tpu.memory_space<vmem>>, vector<128x128xf32>,
    %c0_i32_7 = arith.constant 0 : i32
    %13 = arith.cmpi eq, %arg1, %c0_i32_7 : i32
    %14 = arith.extui %13 : i1 to i32
    %c0_i32_8 = arith.constant 0 : i32
    %15 = arith.cmpi ne, %14, %c0_i32_8 : i32
    scf.if %15 {
      %c0_9 = arith.constant 0 : index
      %c0_10 = arith.constant 0 : index
      %16 = vector.load %arg6[%c0_9, %c0_10] : memref<128x128xf32, #tpu.memory_space<vmem>>, vector<128x128xf32>
      %17 = arith.truncf %16 : vector<128x128xf32> to vector<128x128xbf16>
      %c0_11 = arith.constant 0 : index
      %c0_12 = arith.constant 0 : index
      %18 = vector.load %arg4[%c0_11, %c0_12] : memref<128x128xbf16, #tpu.memory_space<vmem>>, vector<128x128xbf16>
      %cst_13 = arith.constant dense<0.000000e+00> : vector<128x128xf32>
      %19 = tpu.matmul %17, %18, %cst_13 {dimension_numbers = #tpu.dot_dimension_numbers<[1], [0], [0], [1], [0, 0, 1, 1], [], []>} : vector<128x128xbf16>, vector<128x128xbf16>, vector<128x128xf32> -> vector<128x128xf32>
      %cst_14 = arith.constant 0.000000e+00 : f32
      %20 = vector.broadcast %cst_14 : f32 to vector<128x128xf32>
      %21 = arith.maximumf %19, %20 : vector<128x128xf32>
      %c0_15 = arith.constant 0 : index
      %c0_16 = arith.constant 0 : index
      %22 = vector.load %arg5[%c0_15, %c0_16] : memref<128x128xf32, #tpu.memory_space<vmem>>, vector<128x128xf32>
      tpu.vector_store %arg5[%c0_15, %c0_16], %21 {strides = array<i32>} : memref<128x128xf32, #tpu.memory_space<vmem>>, vector<128x128xf32>,
    } else {
    }
    return
  }
  func.func @transform_0(%arg0: i32, %arg1: i32) -> (i32, i32) {
    %c0_i32 = arith.constant 0 : i32
    return %arg0, %arg1 : i32, i32
  }
  func.func @transform_1(%arg0: i32, %arg1: i32) -> (i32, i32) {
    %c0_i32 = arith.constant 0 : i32
    %c0_i32_0 = arith.constant 0 : i32
    %c0_i32_1 = arith.constant 0 : i32
    return %c0_i32, %c0_i32_0 : i32, i32
  }
  func.func @transform_2(%arg0: i32, %arg1: i32) -> (i32, i32) {
    %c0_i32 = arith.constant 0 : i32
    %c0_i32_0 = arith.constant 0 : i32
    %c0_i32_1 = arith.constant 0 : i32
    return %c0_i32, %c0_i32_0 : i32, i32
  }
  func.func @transform_3(%arg0: i32, %arg1: i32) -> (i32, i32) {
    %c0_i32 = arith.constant 0 : i32
    %c0_i32_0 = arith.constant 0 : i32
    return %arg0, %c0_i32 : i32, i32
  }
}

</mosaic_0001>

<llo_original>
// kernel: gcn_forward.1
$region0: #{gcn_forward.1}
  #allocation0 [shape = 'u32[]', space=smem, size = 0x4, offset = 0x4, fixed_abs, tag = 'smem constant byte address 0x4 - core index']
  #allocation1 [shape = 'u32[144,128]{1,0:T(1,128)}', space=vmem, size = 0x12000, scoped, tag = 'internal scratch']
  #allocation2 [shape = 'f32[128,128]{1,0:T(8,128)}', space=vmem, size = 0x10000, scoped, tag = 'scratch operand']
  %s0 = inlined_call_operand.vmem [shape: f32[128,128], index: 0, kind: input, shape index: {}]
  %s1 = inlined_call_operand.vmem [shape: bf16[128,128], index: 1, kind: input, shape index: {}]
  %s2 = inlined_call_operand.vmem [shape: bf16[128,128], index: 2, kind: input, shape index: {}]
  %s3 = inlined_call_operand.vmem [shape: f32[128,128], index: 3, kind: output, shape index: {}]
  %s4 = sld [smem:[#allocation0]]
  $region30: #{gcn_forward.1} parent=0
    _
  %s6 = ssub.s32 1, %s4
  %s7 = scalar_select 0, %s6, %s4
  // Predicated region
  $region2: #{gcn_forward.1} parent=0 // pred_check
    _
  $region3: #{gcn_forward.1} parent=0 // pred_check_branch
    %9 = sbr.rel (0) target = $region5
  $region4: #{gcn_forward.1} parent=0 // pred_region
    _
  $region5: #{gcn_forward.1} parent=0 // pred_fallthru
    _
  // Predicated region
  $region6: #{gcn_forward.1} parent=0 // pred_check
    _
  $region7: #{gcn_forward.1} parent=0 // pred_check_branch
    %11 = sbr.rel (0) target = $region9
  $region8: #{gcn_forward.1} parent=0 // pred_region
    _
  $region9: #{gcn_forward.1} parent=0 // pred_fallthru
    _
  // Predicated region
  $region10: #{gcn_forward.1} parent=0 // pred_check
    _
  $region11: #{gcn_forward.1} parent=0 // pred_check_branch
    %13 = sbr.rel (0) target = $region13
  $region12: #{gcn_forward.1} parent=0 // pred_region
    _
  $region13: #{gcn_forward.1} parent=0 // pred_fallthru
    _
  %p15 = scmp.eq.s32.totalorder 0, 0
  // Predicated region
  $region14: #{gcn_forward.1} parent=0 // pred_check
    %p16 = pneg %p15
  $region15: #{gcn_forward.1} parent=0 // pred_check_branch
    %18 = sbr.rel (%p16) target = $region17
  $region16: #{gcn_forward.1} parent=0 // pred_region
    %19 = vst [vmem:[#allocation2] sm:$0xff] 0.0
    %20 = vst [vmem:[#allocation2 + $0x8] sm:$0xff] 0.0
    %21 = vst [vmem:[#allocation2 + $0x10] sm:$0xff] 0.0
    %22 = vst [vmem:[#allocation2 + $0x18] sm:$0xff] 0.0
    %23 = vst [vmem:[#allocation2 + $0x20] sm:$0xff] 0.0
    %24 = vst [vmem:[#allocation2 + $0x28] sm:$0xff] 0.0
    %25 = vst [vmem:[#allocation2 + $0x30] sm:$0xff] 0.0
    %26 = vst [vmem:[#allocation2 + $0x38] sm:$0xff] 0.0
    %27 = vst [vmem:[#allocation2 + $0x40] sm:$0xff] 0.0
    %28 = vst [vmem:[#allocation2 + $0x48] sm:$0xff] 0.0
    %29 = vst [vmem:[#allocation2 + $0x50] sm:$0xff] 0.0
    %30 = vst [vmem:[#allocation2 + $0x58] sm:$0xff] 0.0
    %31 = vst [vmem:[#allocation2 + $0x60] sm:$0xff] 0.0
    %32 = vst [vmem:[#allocation2 + $0x68] sm:$0xff] 0.0
    %33 = vst [vmem:[#allocation2 + $0x70] sm:$0xff] 0.0
    %34 = vst [vmem:[#allocation2 + $0x78] sm:$0xff] 0.0
  $region17: #{gcn_forward.1} parent=0 // pred_fallthru
    _
  %s35 = smul.u32 0, 128
  %s36 = sshra.s32 %s35, 3
  %s37 = sand.u32 %s35, 7
  %s38 = smul.addr %s36, 4
  %s39 = scalar_lea.vmem %s1, %s38
  %v40 = vld [vmem:[%s39] sm:$0xf]
  %v41 = vld [vmem:[%s39 + $0x4] sm:$0xf]
  %v42 = vld [vmem:[%s39 + $0x8] sm:$0xf]
  %v43 = vld [vmem:[%s39 + $0xc] sm:$0xf]
  %v44 = vld [vmem:[%s39 + $0x10] sm:$0xf]
  %v45 = vld [vmem:[%s39 + $0x14] sm:$0xf]
  %v46 = vld [vmem:[%s39 + $0x18] sm:$0xf]
  %v47 = vld [vmem:[%s39 + $0x1c] sm:$0xf]
  %v48 = vld [vmem:[%s39 + $0x20] sm:$0xf]
  %v49 = vld [vmem:[%s39 + $0x24] sm:$0xf]
  %v50 = vld [vmem:[%s39 + $0x28] sm:$0xf]
  %v51 = vld [vmem:[%s39 + $0x2c] sm:$0xf]
  %v52 = vld [vmem:[%s39 + $0x30] sm:$0xf]
  %v53 = vld [vmem:[%s39 + $0x34] sm:$0xf]
  %v54 = vld [vmem:[%s39 + $0x38] sm:$0xf]
  %v55 = vld [vmem:[%s39 + $0x3c] sm:$0xf]
  %v56 = vld [vmem:[#allocation2] sm:$0xff]
  %v57 = vld [vmem:[#allocation2 + $0x8] sm:$0xff]
  %v58 = vld [vmem:[#allocation2 + $0x10] sm:$0xff]
  %v59 = vld [vmem:[#allocation2 + $0x18] sm:$0xff]
  %v60 = vld [vmem:[#allocation2 + $0x20] sm:$0xff]
  %v61 = vld [vmem:[#allocation2 + $0x28] sm:$0xff]
  %v62 = vld [vmem:[#allocation2 + $0x30] sm:$0xff]
  %v63 = vld [vmem:[#allocation2 + $0x38] sm:$0xff]
  %v64 = vld [vmem:[#allocation2 + $0x40] sm:$0xff]
  %v65 = vld [vmem:[#allocation2 + $0x48] sm:$0xff]
  %v66 = vld [vmem:[#allocation2 + $0x50] sm:$0xff]
  %v67 = vld [vmem:[#allocation2 + $0x58] sm:$0xff]
  %v68 = vld [vmem:[#allocation2 + $0x60] sm:$0xff]
  %v69 = vld [vmem:[#allocation2 + $0x68] sm:$0xff]
  %v70 = vld [vmem:[#allocation2 + $0x70] sm:$0xff]
  %v71 = vld [vmem:[#allocation2 + $0x78] sm:$0xff]
  %v72 = vld [vmem:[%s0] sm:$0xff]
  %v73 = vld [vmem:[%s0 + $0x8] sm:$0xff]
  %v74 = vld [vmem:[%s0 + $0x10] sm:$0xff]
  %v75 = vld [vmem:[%s0 + $0x18] sm:$0xff]
  %v76 = vld [vmem:[%s0 + $0x20] sm:$0xff]
  %v77 = vld [vmem:[%s0 + $0x28] sm:$0xff]
  %v78 = vld [vmem:[%s0 + $0x30] sm:$0xff]
  %v79 = vld [vmem:[%s0 + $0x38] sm:$0xff]
  %v80 = vld [vmem:[%s0 + $0x40] sm:$0xff]
  %v81 = vld [vmem:[%s0 + $0x48] sm:$0xff]
  %v82 = vld [vmem:[%s0 + $0x50] sm:$0xff]
  %v83 = vld [vmem:[%s0 + $0x58] sm:$0xff]
  %v84 = vld [vmem:[%s0 + $0x60] sm:$0xff]
  %v85 = vld [vmem:[%s0 + $0x68] sm:$0xff]
  %v86 = vld [vmem:[%s0 + $0x70] sm:$0xff]
  %v87 = vld [vmem:[%s0 + $0x78] sm:$0xff]
  %v88 = vpack.c.bf16 %v73, %v72
  %v89 = vpack.c.bf16 %v75, %v74
  %v90 = vpack.c.bf16 %v77, %v76
  %v91 = vpack.c.bf16 %v79, %v78
  %v92 = vpack.c.bf16 %v81, %v80
  %v93 = vpack.c.bf16 %v83, %v82
  %v94 = vpack.c.bf16 %v85, %v84
  %v95 = vpack.c.bf16 %v87, %v86
  %v112 = vunpack.c.l.b16 %v40
  %v113 = vunpack.c.l.b16 %v41
  %v114 = vunpack.c.l.b16 %v42
  %v115 = vunpack.c.l.b16 %v43
  %v116 = vunpack.c.l.b16 %v44
  %v117 = vunpack.c.l.b16 %v45
  %v118 = vunpack.c.l.b16 %v46
  %v119 = vunpack.c.l.b16 %v47
  %v120 = vunpack.c.l.b16 %v48
  %v121 = vunpack.c.l.b16 %v49
  %v122 = vunpack.c.l.b16 %v50
  %v123 = vunpack.c.l.b16 %v51
  %v124 = vunpack.c.l.b16 %v52
  %v125 = vunpack.c.l.b16 %v53
  %v126 = vunpack.c.l.b16 %v54
  %v127 = vunpack.c.l.b16 %v55
  %v128 = vpack.c.b16 %v113, %v112
  %v129 = vpack.c.b16 %v115, %v114
  %v130 = vpack.c.b16 %v117, %v116
  %v131 = vpack.c.b16 %v119, %v118
  %v132 = vpack.c.b16 %v121, %v120
  %v133 = vpack.c.b16 %v123, %v122
  %v134 = vpack.c.b16 %v125, %v124
  %v135 = vpack.c.b16 %v127, %v126
  %144 = vmatprep.subr.bf16.mxu0 0
  %145 = vmatpush1.bf16.msra.mxu0 %v128
  %146 = vmatprep.subr.bf16.mxu0 0
  %147 = vmatpush1.bf16.msra.mxu0 %v129
  %148 = vmatprep.subr.bf16.mxu0 0
  %149 = vmatpush1.bf16.msra.mxu0 %v130
  %150 = vmatprep.subr.bf16.mxu0 0
  %151 = vmatpush1.bf16.msra.mxu0 %v131
  %152 = vmatprep.subr.bf16.mxu0 0
  %153 = vmatpush1.bf16.msra.mxu0 %v132
  %154 = vmatprep.subr.bf16.mxu0 0
  %155 = vmatpush1.bf16.msra.mxu0 %v133
  %156 = vmatprep.subr.bf16.mxu0 0
  %157 = vmatpush1.bf16.msra.mxu0 %v134
  %158 = vmatprep.subr.bf16.mxu0 0
  %159 = vmatpush1.bf16.msra.mxu0 %v135
  %160 = vmatprep.subr.bf16.mxu0 0
  %161 = vmatpush1.bf16.msra.mxu0 0
  %162 = vmatprep.subr.bf16.mxu0 0
  %163 = vmatpush1.bf16.msra.mxu0 0
  %164 = vmatprep.subr.bf16.mxu0 0
  %165 = vmatpush1.bf16.msra.mxu0 0
  %166 = vmatprep.subr.bf16.mxu0 0
  %167 = vmatpush1.bf16.msra.mxu0 0
  %168 = vmatprep.subr.bf16.mxu0 0
  %169 = vmatpush1.bf16.msra.mxu0 0
  %170 = vmatprep.subr.bf16.mxu0 0
  %171 = vmatpush1.bf16.msra.mxu0 0
  %172 = vmatprep.subr.bf16.mxu0 0
  %173 = vmatpush1.bf16.msra.mxu0 0
  %174 = vmatprep.subr.bf16.mxu0 0
  %175 = vmatpush1.bf16.msra.mxu0 0
  %176 = vmatprep.mubr.bf16.mxu0 0
  %177 = vmatmul.mubr.bf16.gmra.mrb[0].mxu0 %v88
  %v178 = vpop.f32.mrb[0].mxu0
  %v179 = vadd.f32 0.0, %v178
  %v180 = vpop.f32.mrb[0].mxu0
  %v181 = vpop.f32.mrb[0].mxu0
  %v182 = vadd.f32 0.0, %v181
  %v183 = vpop.f32.mrb[0].mxu0
  %184 = vmatprep.mubr.bf16.mxu0 0
  %185 = vmatmul.mubr.bf16.gmra.mrb[0].mxu0 %v89
  %v186 = vpop.f32.mrb[0].mxu0
  %v187 = vadd.f32 0.0, %v186
  %v188 = vpop.f32.mrb[0].mxu0
  %v189 = vpop.f32.mrb[0].mxu0
  %v190 = vadd.f32 0.0, %v189
  %v191 = vpop.f32.mrb[0].mxu0
  %192 = vmatprep.mubr.bf16.mxu0 0
  %193 = vmatmul.mubr.bf16.gmra.mrb[0].mxu0 %v90
  %v194 = vpop.f32.mrb[0].mxu0
  %v195 = vadd.f32 0.0, %v194
  %v196 = vpop.f32.mrb[0].mxu0
  %v197 = vpop.f32.mrb[0].mxu0
  %v198 = vadd.f32 0.0, %v197
  %v199 = vpop.f32.mrb[0].mxu0
  %200 = vmatprep.mubr.bf16.mxu0 0
  %201 = vmatmul.mubr.bf16.gmra.mrb[0].mxu0 %v91
  %v202 = vpop.f32.mrb[0].mxu0
  %v203 = vadd.f32 0.0, %v202
  %v204 = vpop.f32.mrb[0].mxu0
  %v205 = vpop.f32.mrb[0].mxu0
  %v206 = vadd.f32 0.0, %v205
  %v207 = vpop.f32.mrb[0].mxu0
  %208 = vmatprep.mubr.bf16.mxu0 0
  %209 = vmatmul.mubr.bf16.gmra.mrb[0].mxu0 %v92
  %v210 = vpop.f32.mrb[0].mxu0
  %v211 = vadd.f32 0.0, %v210
  %v212 = vpop.f32.mrb[0].mxu0
  %v213 = vpop.f32.mrb[0].mxu0
  %v214 = vadd.f32 0.0, %v213
  %v215 = vpop.f32.mrb[0].mxu0
  %216 = vmatprep.mubr.bf16.mxu0 0
  %217 = vmatmul.mubr.bf16.gmra.mrb[0].mxu0 %v93
  %v218 = vpop.f32.mrb[0].mxu0
  %v219 = vadd.f32 0.0, %v218
  %v220 = vpop.f32.mrb[0].mxu0
  %v221 = vpop.f32.mrb[0].mxu0
  %v222 = vadd.f32 0.0, %v221
  %v223 = vpop.f32.mrb[0].mxu0
  %224 = vmatprep.mubr.bf16.mxu0 0
  %225 = vmatmul.mubr.bf16.gmra.mrb[0].mxu0 %v94
  %v226 = vpop.f32.mrb[0].mxu0
  %v227 = vadd.f32 0.0, %v226
  %v228 = vpop.f32.mrb[0].mxu0
  %v229 = vpop.f32.mrb[0].mxu0
  %v230 = vadd.f32 0.0, %v229
  %v231 = vpop.f32.mrb[0].mxu0
  %232 = vmatprep.mubr.bf16.mxu0 0
  %233 = vmatmul.mubr.bf16.gmra.mrb[0].mxu0 %v95
  %v234 = vpop.f32.mrb[0].mxu0
  %v235 = vadd.f32 0.0, %v234
  %v236 = vpop.f32.mrb[0].mxu0
  %v237 = vpop.f32.mrb[0].mxu0
  %v238 = vadd.f32 0.0, %v237
  %v239 = vpop.f32.mrb[0].mxu0
  %240 = vdwg.mxu0
  %v241 = vadd.f32 %v56, %v179
  %v242 = vadd.f32 %v57, %v182
  %v243 = vadd.f32 %v58, %v187
  %v244 = vadd.f32 %v59, %v190
  %v245 = vadd.f32 %v60, %v195
  %v246 = vadd.f32 %v61, %v198
  %v247 = vadd.f32 %v62, %v203
  %v248 = vadd.f32 %v63, %v206
  %v249 = vadd.f32 %v64, %v211
  %v250 = vadd.f32 %v65, %v214
  %v251 = vadd.f32 %v66, %v219
  %v252 = vadd.f32 %v67, %v222
  %v253 = vadd.f32 %v68, %v227
  %v254 = vadd.f32 %v69, %v230
  %v255 = vadd.f32 %v70, %v235
  %v256 = vadd.f32 %v71, %v238
  %257 = vst [vmem:[#allocation2] sm:$0xff] %v241
  %258 = vst [vmem:[#allocation2 + $0x8] sm:$0xff] %v242
  %259 = vst [vmem:[#allocation2 + $0x10] sm:$0xff] %v243
  %260 = vst [vmem:[#allocation2 + $0x18] sm:$0xff] %v244
  %261 = vst [vmem:[#allocation2 + $0x20] sm:$0xff] %v245
  %262 = vst [vmem:[#allocation2 + $0x28] sm:$0xff] %v246
  %263 = vst [vmem:[#allocation2 + $0x30] sm:$0xff] %v247
  %264 = vst [vmem:[#allocation2 + $0x38] sm:$0xff] %v248
  %265 = vst [vmem:[#allocation2 + $0x40] sm:$0xff] %v249
  %266 = vst [vmem:[#allocation2 + $0x48] sm:$0xff] %v250
  %267 = vst [vmem:[#allocation2 + $0x50] sm:$0xff] %v251
  %268 = vst [vmem:[#allocation2 + $0x58] sm:$0xff] %v252
  %269 = vst [vmem:[#allocation2 + $0x60] sm:$0xff] %v253
  %270 = vst [vmem:[#allocation2 + $0x68] sm:$0xff] %v254
  %271 = vst [vmem:[#allocation2 + $0x70] sm:$0xff] %v255
  %272 = vst [vmem:[#allocation2 + $0x78] sm:$0xff] %v256
  // Predicated region
  $region18: #{gcn_forward.1} parent=0 // pred_check
    %p273 = pneg %p15
  $region19: #{gcn_forward.1} parent=0 // pred_check_branch
    %275 = sbr.rel (%p273) target = $region21
  $region20: #{gcn_forward.1} parent=0 // pred_region
    %v276 = vld [vmem:[#allocation2] sm:$0xff]
    %v277 = vld [vmem:[#allocation2 + $0x8] sm:$0xff]
    %v278 = vld [vmem:[#allocation2 + $0x10] sm:$0xff]
    %v279 = vld [vmem:[#allocation2 + $0x18] sm:$0xff]
    %v280 = vld [vmem:[#allocation2 + $0x20] sm:$0xff]
    %v281 = vld [vmem:[#allocation2 + $0x28] sm:$0xff]
    %v282 = vld [vmem:[#allocation2 + $0x30] sm:$0xff]
    %v283 = vld [vmem:[#allocation2 + $0x38] sm:$0xff]
    %v284 = vld [vmem:[#allocation2 + $0x40] sm:$0xff]
    %v285 = vld [vmem:[#allocation2 + $0x48] sm:$0xff]
    %v286 = vld [vmem:[#allocation2 + $0x50] sm:$0xff]
    %v287 = vld [vmem:[#allocation2 + $0x58] sm:$0xff]
    %v288 = vld [vmem:[#allocation2 + $0x60] sm:$0xff]
    %v289 = vld [vmem:[#allocation2 + $0x68] sm:$0xff]
    %v290 = vld [vmem:[#allocation2 + $0x70] sm:$0xff]
    %v291 = vld [vmem:[#allocation2 + $0x78] sm:$0xff]
    %v292 = vpack.c.bf16 %v277, %v276
    %v293 = vpack.c.bf16 %v279, %v278
    %v294 = vpack.c.bf16 %v281, %v280
    %v295 = vpack.c.bf16 %v283, %v282
    %v296 = vpack.c.bf16 %v285, %v284
    %v297 = vpack.c.bf16 %v287, %v286
    %v298 = vpack.c.bf16 %v289, %v288
    %v299 = vpack.c.bf16 %v291, %v290
    %v300 = vld [vmem:[%s2] sm:$0xf]
    %v301 = vld [vmem:[%s2 + $0x4] sm:$0xf]
    %v302 = vld [vmem:[%s2 + $0x8] sm:$0xf]
    %v303 = vld [vmem:[%s2 + $0xc] sm:$0xf]
    %v304 = vld [vmem:[%s2 + $0x10] sm:$0xf]
    %v305 = vld [vmem:[%s2 + $0x14] sm:$0xf]
    %v306 = vld [vmem:[%s2 + $0x18] sm:$0xf]
    %v307 = vld [vmem:[%s2 + $0x1c] sm:$0xf]
    %v308 = vld [vmem:[%s2 + $0x20] sm:$0xf]
    %v309 = vld [vmem:[%s2 + $0x24] sm:$0xf]
    %v310 = vld [vmem:[%s2 + $0x28] sm:$0xf]
    %v311 = vld [vmem:[%s2 + $0x2c] sm:$0xf]
    %v312 = vld [vmem:[%s2 + $0x30] sm:$0xf]
    %v313 = vld [vmem:[%s2 + $0x34] sm:$0xf]
    %v314 = vld [vmem:[%s2 + $0x38] sm:$0xf]
    %v315 = vld [vmem:[%s2 + $0x3c] sm:$0xf]
    %v332 = vunpack.c.l.b16 %v300
    %v333 = vunpack.c.l.b16 %v301
    %v334 = vunpack.c.l.b16 %v302
    %v335 = vunpack.c.l.b16 %v303
    %v336 = vunpack.c.l.b16 %v304
    %v337 = vunpack.c.l.b16 %v305
    %v338 = vunpack.c.l.b16 %v306
    %v339 = vunpack.c.l.b16 %v307
    %v340 = vunpack.c.l.b16 %v308
    %v341 = vunpack.c.l.b16 %v309
    %v342 = vunpack.c.l.b16 %v310
    %v343 = vunpack.c.l.b16 %v311
    %v344 = vunpack.c.l.b16 %v312
    %v345 = vunpack.c.l.b16 %v313
    %v346 = vunpack.c.l.b16 %v314
    %v347 = vunpack.c.l.b16 %v315
    %v348 = vpack.c.b16 %v333, %v332
    %v349 = vpack.c.b16 %v335, %v334
    %v350 = vpack.c.b16 %v337, %v336
    %v351 = vpack.c.b16 %v339, %v338
    %v352 = vpack.c.b16 %v341, %v340
    %v353 = vpack.c.b16 %v343, %v342
    %v354 = vpack.c.b16 %v345, %v344
    %v355 = vpack.c.b16 %v347, %v346
    %364 = vmatprep.subr.bf16.mxu0 0
    %365 = vmatpush1.bf16.msra.mxu0 %v348
    %366 = vmatprep.subr.bf16.mxu0 0
    %367 = vmatpush1.bf16.msra.mxu0 %v349
    %368 = vmatprep.subr.bf16.mxu0 0
    %369 = vmatpush1.bf16.msra.mxu0 %v350
    %370 = vmatprep.subr.bf16.mxu0 0
    %371 = vmatpush1.bf16.msra.mxu0 %v351
    %372 = vmatprep.subr.bf16.mxu0 0
    %373 = vmatpush1.bf16.msra.mxu0 %v352
    %374 = vmatprep.subr.bf16.mxu0 0
    %375 = vmatpush1.bf16.msra.mxu0 %v353
    %376 = vmatprep.subr.bf16.mxu0 0
    %377 = vmatpush1.bf16.msra.mxu0 %v354
    %378 = vmatprep.subr.bf16.mxu0 0
    %379 = vmatpush1.bf16.msra.mxu0 %v355
    %380 = vmatprep.subr.bf16.mxu0 0
    %381 = vmatpush1.bf16.msra.mxu0 0
    %382 = vmatprep.subr.bf16.mxu0 0
    %383 = vmatpush1.bf16.msra.mxu0 0
    %384 = vmatprep.subr.bf16.mxu0 0
    %385 = vmatpush1.bf16.msra.mxu0 0
    %386 = vmatprep.subr.bf16.mxu0 0
    %387 = vmatpush1.bf16.msra.mxu0 0
    %388 = vmatprep.subr.bf16.mxu0 0
    %389 = vmatpush1.bf16.msra.mxu0 0
    %390 = vmatprep.subr.bf16.mxu0 0
    %391 = vmatpush1.bf16.msra.mxu0 0
    %392 = vmatprep.subr.bf16.mxu0 0
    %393 = vmatpush1.bf16.msra.mxu0 0
    %394 = vmatprep.subr.bf16.mxu0 0
    %395 = vmatpush1.bf16.msra.mxu0 0
    %396 = vmatprep.mubr.bf16.mxu0 0
    %397 = vmatmul.mubr.bf16.gmra.mrb[0].mxu0 %v292
    %v398 = vpop.f32.mrb[0].mxu0
    %v399 = vadd.f32 0.0, %v398
    %v400 = vpop.f32.mrb[0].mxu0
    %v401 = vpop.f32.mrb[0].mxu0
    %v402 = vadd.f32 0.0, %v401
    %v403 = vpop.f32.mrb[0].mxu0
    %404 = vmatprep.mubr.bf16.mxu0 0
    %405 = vmatmul.mubr.bf16.gmra.mrb[0].mxu0 %v293
    %v406 = vpop.f32.mrb[0].mxu0
    %v407 = vadd.f32 0.0, %v406
    %v408 = vpop.f32.mrb[0].mxu0
    %v409 = vpop.f32.mrb[0].mxu0
    %v410 = vadd.f32 0.0, %v409
    %v411 = vpop.f32.mrb[0].mxu0
    %412 = vmatprep.mubr.bf16.mxu0 0
    %413 = vmatmul.mubr.bf16.gmra.mrb[0].mxu0 %v294
    %v414 = vpop.f32.mrb[0].mxu0
    %v415 = vadd.f32 0.0, %v414
    %v416 = vpop.f32.mrb[0].mxu0
    %v417 = vpop.f32.mrb[0].mxu0
    %v418 = vadd.f32 0.0, %v417
    %v419 = vpop.f32.mrb[0].mxu0
    %420 = vmatprep.mubr.bf16.mxu0 0
    %421 = vmatmul.mubr.bf16.gmra.mrb[0].mxu0 %v295
    %v422 = vpop.f32.mrb[0].mxu0
    %v423 = vadd.f32 0.0, %v422
    %v424 = vpop.f32.mrb[0].mxu0
    %v425 = vpop.f32.mrb[0].mxu0
    %v426 = vadd.f32 0.0, %v425
    %v427 = vpop.f32.mrb[0].mxu0
    %428 = vmatprep.mubr.bf16.mxu0 0
    %429 = vmatmul.mubr.bf16.gmra.mrb[0].mxu0 %v296
    %v430 = vpop.f32.mrb[0].mxu0
    %v431 = vadd.f32 0.0, %v430
    %v432 = vpop.f32.mrb[0].mxu0
    %v433 = vpop.f32.mrb[0].mxu0
    %v434 = vadd.f32 0.0, %v433
    %v435 = vpop.f32.mrb[0].mxu0
    %436 = vmatprep.mubr.bf16.mxu0 0
    %437 = vmatmul.mubr.bf16.gmra.mrb[0].mxu0 %v297
    %v438 = vpop.f32.mrb[0].mxu0
    %v439 = vadd.f32 0.0, %v438
    %v440 = vpop.f32.mrb[0].mxu0
    %v441 = vpop.f32.mrb[0].mxu0
    %v442 = vadd.f32 0.0, %v441
    %v443 = vpop.f32.mrb[0].mxu0
    %444 = vmatprep.mubr.bf16.mxu0 0
    %445 = vmatmul.mubr.bf16.gmra.mrb[0].mxu0 %v298
    %v446 = vpop.f32.mrb[0].mxu0
    %v447 = vadd.f32 0.0, %v446
    %v448 = vpop.f32.mrb[0].mxu0
    %v449 = vpop.f32.mrb[0].mxu0
    %v450 = vadd.f32 0.0, %v449
    %v451 = vpop.f32.mrb[0].mxu0
    %452 = vmatprep.mubr.bf16.mxu0 0
    %453 = vmatmul.mubr.bf16.gmra.mrb[0].mxu0 %v299
    %v454 = vpop.f32.mrb[0].mxu0
    %v455 = vadd.f32 0.0, %v454
    %v456 = vpop.f32.mrb[0].mxu0
    %v457 = vpop.f32.mrb[0].mxu0
    %v458 = vadd.f32 0.0, %v457
    %v459 = vpop.f32.mrb[0].mxu0
    %460 = vdwg.mxu0
    %v461 = vmax.f32 %v399, 0.0
    %v462 = vmax.f32 %v402, 0.0
    %v463 = vmax.f32 %v407, 0.0
    %v464 = vmax.f32 %v410, 0.0
    %v465 = vmax.f32 %v415, 0.0
    %v466 = vmax.f32 %v418, 0.0
    %v467 = vmax.f32 %v423, 0.0
    %v468 = vmax.f32 %v426, 0.0
    %v469 = vmax.f32 %v431, 0.0
    %v470 = vmax.f32 %v434, 0.0
    %v471 = vmax.f32 %v439, 0.0
    %v472 = vmax.f32 %v442, 0.0
    %v473 = vmax.f32 %v447, 0.0
    %v474 = vmax.f32 %v450, 0.0
    %v475 = vmax.f32 %v455, 0.0
    %v476 = vmax.f32 %v458, 0.0
    %477 = vst [vmem:[%s3] sm:$0xff] %v461
    %478 = vst [vmem:[%s3 + $0x8] sm:$0xff] %v462
    %479 = vst [vmem:[%s3 + $0x10] sm:$0xff] %v463
    %480 = vst [vmem:[%s3 + $0x18] sm:$0xff] %v464
    %481 = vst [vmem:[%s3 + $0x20] sm:$0xff] %v465
    %482 = vst [vmem:[%s3 + $0x28] sm:$0xff] %v466
    %483 = vst [vmem:[%s3 + $0x30] sm:$0xff] %v467
    %484 = vst [vmem:[%s3 + $0x38] sm:$0xff] %v468
    %485 = vst [vmem:[%s3 + $0x40] sm:$0xff] %v469
    %486 = vst [vmem:[%s3 + $0x48] sm:$0xff] %v470
    %487 = vst [vmem:[%s3 + $0x50] sm:$0xff] %v471
    %488 = vst [vmem:[%s3 + $0x58] sm:$0xff] %v472
    %489 = vst [vmem:[%s3 + $0x60] sm:$0xff] %v473
    %490 = vst [vmem:[%s3 + $0x68] sm:$0xff] %v474
    %491 = vst [vmem:[%s3 + $0x70] sm:$0xff] %v475
    %492 = vst [vmem:[%s3 + $0x78] sm:$0xff] %v476
  $region21: #{gcn_forward.1} parent=0 // pred_fallthru
    _
  // Predicated region
  $region22: #{gcn_forward.1} parent=0 // pred_check
    _
  $region23: #{gcn_forward.1} parent=0 // pred_check_branch
    %494 = sbr.rel (0) target = $region25
  $region24: #{gcn_forward.1} parent=0 // pred_region
    _
  $region25: #{gcn_forward.1} parent=0 // pred_fallthru
    _
  // Predicated region
  $region26: #{gcn_forward.1} parent=0 // pred_check
    _
  $region27: #{gcn_forward.1} parent=0 // pred_check_branch
    %496 = sbr.rel (0) target = $region29
  $region28: #{gcn_forward.1} parent=0 // pred_region
    _
  $region29: #{gcn_forward.1} parent=0 // pred_fallthru
    _

</llo_original>
